<compile_context>
chip_gen: v7x
topology: tpu7x:2x2x1
jax: 0.10.0
libtpu: 0.0.40
codegen_flags: <defaults>
</compile_context>

<pallas_src>
import functools

import jax
import jax.numpy as jnp
from jax.experimental import pallas as pl
from jax.experimental.pallas import tpu as pltpu


# ---------------------------------------------------------------------------
# Kernels
# ---------------------------------------------------------------------------
def _entropy_kernel_single(x_ref, o_ref, *, tile_n, total_rows, steps_per_split):
    """Whole class axis per step (common case: C fits comfortably in VMEM)."""
    split = pl.program_id(0)   # "parallel": independent partial sums
    step = pl.program_id(1)    # "arbitrary": reduction over row tiles

    @pl.when(step == 0)
    def _init():
        o_ref[...] = jnp.zeros_like(o_ref)

    # Stable entropy without materialising softmax/log-softmax:
    #   p = e/s, log p = z - log s  =>  H = -sum_c p*log p = log(s) - t/s
    x = x_ref[...].astype(jnp.float32)                 # (tile_n, C_pad) f32
    m = jnp.max(x, axis=-1, keepdims=True)             # XLU
    z = x - m
    e = jnp.exp(z)                                     # EUP
    s = jnp.sum(e, axis=-1, keepdims=True)
    t = jnp.sum(e * z, axis=-1, keepdims=True)
    row_ent = jnp.log(s) - t / s                       # (tile_n, 1)

    # Mask tail rows of the last partial tile and fully-clamped padding tiles.
    tile_idx = split * steps_per_split + step
    row = tile_idx * tile_n + jax.lax.broadcasted_iota(jnp.int32, (tile_n, 1), 0)
    row_ent = jnp.where(row < total_rows, row_ent, 0.0)

    # Lane-dense (1, 128) running sum per split; wrapper reads lane 0.
    o_ref[...] += jnp.sum(row_ent)


def _entropy_kernel_chunked(x_ref, o_ref, m_sc, s_sc, t_sc, *,
                            tile_n, total_rows, steps_per_split):
    """Class axis chunked (vocab-scale C): online flash-softmax m/s/t state."""
    split = pl.program_id(0)
    rstep = pl.program_id(1)
    cstep = pl.program_id(2)
    n_csteps = pl.num_programs(2)

    @pl.when((rstep == 0) & (cstep == 0))
    def _init_out():
        o_ref[...] = jnp.zeros_like(o_ref)

    @pl.when(cstep == 0)
    def _init_state():
        # Finite "minus infinity" keeps alpha/(m_old-m_new)*s math NaN-free.
        m_sc[...] = jnp.full_like(m_sc, -3e38)
        s_sc[...] = jnp.zeros_like(s_sc)
        t_sc[...] = jnp.zeros_like(t_sc)

    x = x_ref[...].astype(jnp.float32)                 # (tile_n, tile_c) f32
    m_old = m_sc[...]
    s_old = s_sc[...]
    m_new = jnp.maximum(m_old, jnp.max(x, axis=-1, keepdims=True))
    alpha = jnp.exp(m_old - m_new)
    z = x - m_new
    e = jnp.exp(z)
    # Rescale the running sums to the new max, then add this chunk.
    t_sc[...] = alpha * (t_sc[...] + (m_old - m_new) * s_old) \
        + jnp.sum(e * z, axis=-1, keepdims=True)
    s_sc[...] = alpha * s_old + jnp.sum(e, axis=-1, keepdims=True)
    m_sc[...] = m_new

    @pl.when(cstep == n_csteps - 1)
    def _finalize():
        s = s_sc[...]
        row_ent = jnp.log(s) - t_sc[...] / s
        tile_idx = split * steps_per_split + rstep
        row = tile_idx * tile_n + jax.lax.broadcasted_iota(jnp.int32, (tile_n, 1), 0)
        row_ent = jnp.where(row < total_rows, row_ent, 0.0)
        o_ref[...] += jnp.sum(row_ent)


# ---------------------------------------------------------------------------
# Generation-aware configuration
# ---------------------------------------------------------------------------
def _chip_config():
    """Tile byte budget / VMEM scoped limit / split count per TPU generation."""
    kind = ""
    try:
        kind = jax.devices()[0].device_kind.lower()
    except Exception:
        pass
    if "v7" in kind or "7x" in kind:
        # ~3.2 TB/s HBM, 64 MiB VMEM, 2 TensorCores/chip.
        return dict(budget_bytes=10 * 1024 * 1024,
                    vmem_limit_bytes=48 * 1024 * 1024,
                    num_splits=2)
    if "v6" in kind:
        # ~1.4 TB/s HBM, 128 MiB VMEM, 1 TC.
        return dict(budget_bytes=8 * 1024 * 1024,
                    vmem_limit_bytes=96 * 1024 * 1024,
                    num_splits=1)
    # v5e / unknown: ~0.8 TB/s HBM, 128 MiB VMEM, 1 TC. Conservative default.
    return dict(budget_bytes=4 * 1024 * 1024,
                vmem_limit_bytes=64 * 1024 * 1024,
                num_splits=1)


# ---------------------------------------------------------------------------
# Wrapper
# ---------------------------------------------------------------------------
def entropy_loss(x, *, tile_n=None, tile_c=None, num_splits=None, reduction="mean"):
    """Softmax-entropy of logits x with shape (N, C). Returns f32 scalar."""
    n, c = x.shape
    itemsize = jnp.dtype(x.dtype).itemsize
    cfg = _chip_config()
    lane = 128
    mult = 16 if itemsize < 4 else 8       # bf16 packs (16,128); f32 packs (8,128)

    if num_splits is None:
        num_splits = cfg["num_splits"]

    # ---- class-axis tile -------------------------------------------------
    if tile_c is None:
        c_lanes = pl.cdiv(c, lane) * lane
        row_bytes = c_lanes * itemsize
        if row_bytes >= 256 * 1024:
            # Vocab-scale rows: chunk the class axis (online accumulation),
            # aiming for >= ~256 rows per tile within the byte budget.
            tile_c = (cfg["budget_bytes"] // (256 * itemsize)) // lane * lane
            tile_c = max(lane, min(c_lanes, tile_c))
        else:
            tile_c = c_lanes
    else:
        tile_c = max(lane, pl.cdiv(tile_c, lane) * lane)
    c_pad = pl.cdiv(c, tile_c) * tile_c
    tile_c = min(tile_c, c_pad)
    c_steps = c_pad // tile_c

    # ---- row tile: byte budget AND VMEM (incl. f32 upcast temps) ----------
    per_row_vmem = 2 * tile_c * itemsize + 3 * tile_c * 4   # 2x dbl-buf in + f32 temps
    if c_steps > 1:
        per_row_vmem += 3 * lane * 4                         # (tile_n,1) f32 m/s/t state
    if tile_n is None:
        rows_budget = max(1, cfg["budget_bytes"] // (tile_c * itemsize))
        rows_vmem = max(1, int(0.7 * cfg["vmem_limit_bytes"]) // per_row_vmem)
        tile_n = min(rows_budget, rows_vmem)                 # no hard row cap
    tile_n = min(tile_n, pl.cdiv(n, mult) * mult)
    tile_n = max(mult, (tile_n // mult) * mult)

    # ---- pad the class axis (lane/chunk alignment) with a huge negative ---
    if c_pad != c:
        pad_val = float(jnp.finfo(x.dtype).min) / 2          # exp -> 0, e*z -> 0
        x = jnp.pad(x, ((0, 0), (0, c_pad - c)), constant_values=pad_val)

    tiles_total = pl.cdiv(n, tile_n)
    num_splits = max(1, min(num_splits, tiles_total))        # no wasted splits
    steps_per_split = pl.cdiv(tiles_total, num_splits)
    last_block = tiles_total - 1

    cost = pl.CostEstimate(
        flops=8 * n * c_pad,
        transcendentals=n * c_pad + 2 * n,
        bytes_accessed=n * c_pad * itemsize + num_splits * 128 * 4,
    )

    if c_steps == 1:
        kernel = functools.partial(
            _entropy_kernel_single,
            tile_n=tile_n, total_rows=n, steps_per_split=steps_per_split)
        grid = (num_splits, steps_per_split)
        in_specs = [pl.BlockSpec(
            (tile_n, tile_c),
            lambda s, r: (jnp.minimum(s * steps_per_split + r, last_block), 0))]
        out_specs = pl.BlockSpec((1, 128), lambda s, r: (0, s))
        dims = ("parallel", "arbitrary")
        scratch = []
    else:
        kernel = functools.partial(
            _entropy_kernel_chunked,
            tile_n=tile_n, total_rows=n, steps_per_split=steps_per_split)
        grid = (num_splits, steps_per_split, c_steps)
        in_specs = [pl.BlockSpec(
            (tile_n, tile_c),
            lambda s, r, k: (jnp.minimum(s * steps_per_split + r, last_block), k))]
        out_specs = pl.BlockSpec((1, 128), lambda s, r, k: (0, s))
        dims = ("parallel", "arbitrary", "arbitrary")
        scratch = [pltpu.VMEM((tile_n, 1), jnp.float32),
                   pltpu.VMEM((tile_n, 1), jnp.float32),
                   pltpu.VMEM((tile_n, 1), jnp.float32)]

    partials = pl.pallas_call(
        kernel,
        out_shape=jax.ShapeDtypeStruct((1, num_splits * 128), jnp.float32),
        grid=grid,
        in_specs=in_specs,
        out_specs=out_specs,
        scratch_shapes=scratch,
        compiler_params=pltpu.CompilerParams(
            dimension_semantics=dims,
            vmem_limit_bytes=cfg["vmem_limit_bytes"]),
        cost_estimate=cost,
    )(x)

    # Lane 0 of each 128-lane slot holds that split's entropy sum.
    total = jnp.sum(partials.reshape(num_splits, 128)[:, 0])
    if reduction == "mean":
        return total / jnp.float32(n)
    elif reduction == "sum":
        return total
    else:
        raise NotImplementedError("reduction='none' not implemented")  # TODO(synk)


def entropy_loss_ref(x):
    """Pure-JAX reference matching the PyTorch module (reduction='mean')."""
    xf = x.astype(jnp.float32)
    logp = jax.nn.log_softmax(xf, axis=1)
    p = jnp.exp(logp)
    b = -jnp.sum(p * logp, axis=1)
    return jnp.mean(b)


if __name__ == "__main__":
    key = jax.random.PRNGKey(0)

    # Main case: C = 128 (lane-aligned class axis), N exercises tail masking.
    N, C = 200, 128
    x = jax.random.normal(key, (N, C), dtype=jnp.float32) * 3.0
    ref = jax.block_until_ready(entropy_loss_ref(x))

    # Auto tile (single tile on this small input).
    loss_auto = jax.block_until_ready(entropy_loss(x))
    assert jnp.allclose(loss_auto, ref, rtol=1e-4, atol=1e-5), (loss_auto, ref)

    # Forced small row tile + 2 splits: multi-step accumulation, clamped steps,
    # masked partial last tile.
    loss_tiled = jax.block_until_ready(entropy_loss(x, tile_n=64, num_splits=2))
    assert jnp.allclose(loss_tiled, ref, rtol=1e-4, atol=1e-5), (loss_tiled, ref)

    # C not a multiple of 128: exercises the lane-padding correctness path.
    x3 = jax.random.normal(jax.random.PRNGKey(1), (64, 100), dtype=jnp.float32) * 2.0
    ref3 = jax.block_until_ready(entropy_loss_ref(x3))
    out3 = jax.block_until_ready(entropy_loss(x3))
    assert jnp.allclose(out3, ref3, rtol=1e-4, atol=1e-5), (out3, ref3)

    # Forced class chunking: exercises the online (flash-softmax) kernel path.
    x4 = jax.random.normal(jax.random.PRNGKey(2), (48, 384), dtype=jnp.float32) * 3.0
    ref4 = jax.block_until_ready(entropy_loss_ref(x4))
    out4 = jax.block_until_ready(entropy_loss(x4, tile_n=16, tile_c=128, num_splits=2))
    assert jnp.allclose(out4, ref4, rtol=1e-4, atol=1e-5), (out4, ref4)

    print("KERNEL_OK")
</pallas_src>

<mosaic_0001>
module attributes {stable_mosaic.version = 11 : i64} {
  func.func @_entropy_kernel_single(%arg0: i32, %arg1: i32, %arg2: memref<200x128xf32, #tpu.memory_space<vmem>>, %arg3: memref<1x128xf32, #tpu.memory_space<vmem>>) attributes {dimension_semantics = [#tpu.dimension_semantics<parallel>, #tpu.dimension_semantics<arbitrary>], iteration_bounds = array<i64: 1, 1>, scalar_prefetch = 0 : i64, scratch_operands = 0 : i64, tpu.core_type = #tpu.core_type<tc>, window_params = [{transform_indices = @transform_0, window_bounds = array<i64: 200, 128>}, {transform_indices = @transform_1, window_bounds = array<i64: 1, 128>}]} {
    %c0_i32 = arith.constant 0 : i32
    %0 = arith.cmpi eq, %arg1, %c0_i32 : i32
    %1 = arith.extui %0 : i1 to i32
    %c0_i32_0 = arith.constant 0 : i32
    %2 = arith.cmpi ne, %1, %c0_i32_0 : i32
    scf.if %2 {
      %cst_11 = arith.constant 0.000000e+00 : f32
      %35 = vector.broadcast %cst_11 : f32 to vector<1x128xf32>
      %c0_12 = arith.constant 0 : index
      %c0_13 = arith.constant 0 : index
      %36 = vector.load %arg3[%c0_12, %c0_13] : memref<1x128xf32, #tpu.memory_space<vmem>>, vector<1x128xf32>
      tpu.vector_store %arg3[%c0_12, %c0_13], %35 {strides = array<i32>} : memref<1x128xf32, #tpu.memory_space<vmem>>, vector<1x128xf32>,
    } else {
    }
    %c0 = arith.constant 0 : index
    %c0_1 = arith.constant 0 : index
    %3 = vector.load %arg2[%c0, %c0_1] : memref<200x128xf32, #tpu.memory_space<vmem>>, vector<200x128xf32>
    %cst = arith.constant dense<0xFF800000> : vector<200xf32>
    %4 = vector.multi_reduction <maximumf>, %3, %cst [1] : vector<200x128xf32> to vector<200xf32>
    %5 = vector.shape_cast %4 : vector<200xf32> to vector<200x1xf32>
    %6 = vector.broadcast %5 : vector<200x1xf32> to vector<200x128xf32>
    %7 = arith.subf %3, %6 : vector<200x128xf32>
    %8 = math.exp %7 : vector<200x128xf32>
    %cst_2 = arith.constant dense<0.000000e+00> : vector<200xf32>
    %9 = vector.multi_reduction <add>, %8, %cst_2 [1] : vector<200x128xf32> to vector<200xf32>
    %10 = vector.shape_cast %9 : vector<200xf32> to vector<200x1xf32>
    %11 = arith.mulf %8, %7 : vector<200x128xf32>
    %cst_3 = arith.constant dense<0.000000e+00> : vector<200xf32>
    %12 = vector.multi_reduction <add>, %11, %cst_3 [1] : vector<200x128xf32> to vector<200xf32>
    %13 = vector.shape_cast %12 : vector<200xf32> to vector<200x1xf32>
    %14 = math.log %10 : vector<200x1xf32>
    %15 = arith.divf %13, %10 : vector<200x1xf32>
    %16 = arith.subf %14, %15 : vector<200x1xf32>
    %c1_i32 = arith.constant 1 : i32
    %17 = arith.muli %arg0, %c1_i32 : i32
    %18 = arith.addi %17, %arg1 : i32
    %c200_i32 = arith.constant 200 : i32
    %19 = arith.muli %18, %c200_i32 : i32
    %20 = tpu.iota {dimensions = array<i32: 0>} : vector<200x1xi32>
    %21 = vector.broadcast %19 : i32 to vector<200x1xi32>
    %22 = arith.addi %21, %20 : vector<200x1xi32>
    %c200_i32_4 = arith.constant 200 : i32
    %23 = vector.broadcast %c200_i32_4 : i32 to vector<200x1xi32>
    %24 = arith.cmpi slt, %22, %23 : vector<200x1xi32>
    %cst_5 = arith.constant 0.000000e+00 : f32
    %25 = vector.broadcast %cst_5 : f32 to vector<200x1xf32>
    %26 = arith.select %24, %16, %25 : vector<200x1xi1>, vector<200x1xf32>
    %c0_6 = arith.constant 0 : index
    %c0_7 = arith.constant 0 : index
    %27 = vector.load %arg3[%c0_6, %c0_7] : memref<1x128xf32, #tpu.memory_space<vmem>>, vector<1x128xf32>
    %28 = vector.shape_cast %26 : vector<200x1xf32> to vector<1x200x1xf32>
    %cst_8 = arith.constant dense<0.000000e+00> : vector<1xf32>
    %29 = vector.multi_reduction <add>, %28, %cst_8 [1, 2] : vector<1x200x1xf32> to vector<1xf32>
    %30 = vector.shape_cast %29 : vector<1xf32> to vector<1x1x1xf32>
    %31 = vector.extract %30[0, 0, 0] : f32 from vector<1x1x1xf32>
    %32 = vector.broadcast %31 : f32 to vector<1x128xf32>
    %33 = arith.addf %27, %32 : vector<1x128xf32>
    %c0_9 = arith.constant 0 : index
    %c0_10 = arith.constant 0 : index
    %34 = vector.load %arg3[%c0_9, %c0_10] : memref<1x128xf32, #tpu.memory_space<vmem>>, vector<1x128xf32>
    tpu.vector_store %arg3[%c0_9, %c0_10], %33 {strides = array<i32>} : memref<1x128xf32, #tpu.memory_space<vmem>>, vector<1x128xf32>,
    return
  }
  func.func @transform_0(%arg0: i32, %arg1: i32) -> (i32, i32) {
    %c1_i32 = arith.constant 1 : i32
    %0 = arith.muli %arg0, %c1_i32 : i32
    %1 = arith.addi %0, %arg1 : i32
    %c0_i32 = arith.constant 0 : i32
    %2 = arith.minsi %1, %c0_i32 : i32
    %c0_i32_0 = arith.constant 0 : i32
    %c0_i32_1 = arith.constant 0 : i32
    return %2, %c0_i32_0 : i32, i32
  }
  func.func @transform_1(%arg0: i32, %arg1: i32) -> (i32, i32) {
    %c0_i32 = arith.constant 0 : i32
    %c0_i32_0 = arith.constant 0 : i32
    return %c0_i32, %arg0 : i32, i32
  }
}

</mosaic_0001>

<llo_original>
// kernel: tpu_custom_call.1
$region0: #{tpu_custom_call.1}
  #allocation0 [shape = 'u32[]', space=smem, size = 0x4, offset = 0x4, fixed_abs, tag = 'smem constant byte address 0x4 - core index']
  #allocation1 [shape = 'u32[144,128]{1,0:T(1,128)}', space=vmem, size = 0x12000, scoped, tag = 'internal scratch']
  %s0 = inlined_call_operand.hbm [shape: f32[200,128], index: 0, kind: input, shape index: {}]
  %s1 = inlined_call_operand.hbm [shape: f32[1,128], index: 1, kind: output, shape index: {}]
  %s2 = sld [smem:[#allocation0]]
  $region22: #{tpu_custom_call.1} parent=0
    _
  %s4 = ssub.s32 1, %s2
  %s5 = scalar_select 0, %s4, %s2
  $region1: #{tpu_custom_call.1} parent=0
    #allocation2 [shape = 'u8[102400]{0}', space=vmem, size = 0x19000, scoped, tag = 'input window, operand 0, single buffered']
    #allocation3 [shape = 's32[1]{0}', space=sflag, size = 0x4, scoped, tag = 'scoped memory for tpu_custom_call.1']
    #allocation4 [shape = 's32[1]{0}', space=sflag, size = 0x4, scoped, tag = 'scoped memory for tpu_custom_call.1']
    #allocation5 [shape = 'u8[512]{0}', space=vmem, size = 0x400, scoped, tag = 'output window, operand 0, single buffered']
    %6 = vsyncpa [#allocation3], 0
    %7 = vsyncpa [#allocation4], 0
    // Predicated region
    $region2: #{tpu_custom_call.1} parent=1 // pred_check
      _
    $region3: #{tpu_custom_call.1} parent=1 // pred_check_branch
      %9 = sbr.rel (0) target = $region5
    $region4: #{tpu_custom_call.1} parent=1 // pred_region
      %s10 = sadd.s32 0, 0
      %p11 = scmp.lt.s32.totalorder %s10, 0
      %s12 = scalar_select %p11, %s10, 0
      %s13 = smul.u32 25, %s12
      %s15 = ssub.s32 3200, 3200
      %16 = vsyncadd [#allocation3], %s15
      %s17 = smul.addr %s13, 128
      %s18 = scalar_lea.hbm %s0, %s17
      %s19 = sshll.u32 [#allocation2], 4
      %s20 = int_to_ptr.vmem [resolvable:$true] %s19
      %25 = dma.hbm_to_vmem [thread:$0]  %s18, 3200, %s20, [#allocation3], 128, 128, 8
    $region5: #{tpu_custom_call.1} parent=1 // pred_fallthru
      _
    // Predicated region
    $region6: #{tpu_custom_call.1} parent=1 // pred_check
      _
    $region7: #{tpu_custom_call.1} parent=1 // pred_check_branch
      %27 = sbr.rel (0) target = $region9
    $region8: #{tpu_custom_call.1} parent=1 // pred_region
      %28 = dma.done [#allocation3], 3200
    $region9: #{tpu_custom_call.1} parent=1 // pred_fallthru
      _
    %s29 = sadd.s32 0, 0
    %p30 = scmp.lt.s32.totalorder %s29, 0
    %s31 = scalar_select %p30, %s29, 0
    %s32 = smul.u32 25, %s31
    %p33 = scmp.eq.s32.totalorder 0, 0
    // Predicated region
    $region10: #{tpu_custom_call.1} parent=1 // pred_check
      %p34 = pneg %p33
    $region11: #{tpu_custom_call.1} parent=1 // pred_check_branch
      %36 = sbr.rel (%p34) target = $region13
    $region12: #{tpu_custom_call.1} parent=1 // pred_region
      %37 = vst [vmem:[#allocation5] sm:$0x1] 0.0
    $region13: #{tpu_custom_call.1} parent=1 // pred_fallthru
      _
    %v38 = vld [vmem:[#allocation2] sm:$0xff]
    %v39 = vld [vmem:[#allocation2 + $0x8] sm:$0xff]
    %v40 = vld [vmem:[#allocation2 + $0x10] sm:$0xff]
    %v41 = vld [vmem:[#allocation2 + $0x18] sm:$0xff]
    %v42 = vld [vmem:[#allocation2 + $0x20] sm:$0xff]
    %v43 = vld [vmem:[#allocation2 + $0x28] sm:$0xff]
    %v44 = vld [vmem:[#allocation2 + $0x30] sm:$0xff]
    %v45 = vld [vmem:[#allocation2 + $0x38] sm:$0xff]
    %v46 = vld [vmem:[#allocation2 + $0x40] sm:$0xff]
    %v47 = vld [vmem:[#allocation2 + $0x48] sm:$0xff]
    %v48 = vld [vmem:[#allocation2 + $0x50] sm:$0xff]
    %v49 = vld [vmem:[#allocation2 + $0x58] sm:$0xff]
    %v50 = vld [vmem:[#allocation2 + $0x60] sm:$0xff]
    %v51 = vld [vmem:[#allocation2 + $0x68] sm:$0xff]
    %v52 = vld [vmem:[#allocation2 + $0x70] sm:$0xff]
    %v53 = vld [vmem:[#allocation2 + $0x78] sm:$0xff]
    %v54 = vld [vmem:[#allocation2 + $0x80] sm:$0xff]
    %v55 = vld [vmem:[#allocation2 + $0x88] sm:$0xff]
    %v56 = vld [vmem:[#allocation2 + $0x90] sm:$0xff]
    %v57 = vld [vmem:[#allocation2 + $0x98] sm:$0xff]
    %v58 = vld [vmem:[#allocation2 + $0xa0] sm:$0xff]
    %v59 = vld [vmem:[#allocation2 + $0xa8] sm:$0xff]
    %v60 = vld [vmem:[#allocation2 + $0xb0] sm:$0xff]
    %v61 = vld [vmem:[#allocation2 + $0xb8] sm:$0xff]
    %v62 = vld [vmem:[#allocation2 + $0xc0] sm:$0xff]
    %63 = vmax.xlane.f32.xlu0 %v38
    %v64 = vpop.xlane.xlu0 %63
    %65 = vmax.xlane.f32.xlu0 %v39
    %v66 = vpop.xlane.xlu0 %65
    %67 = vmax.xlane.f32.xlu0 %v40
    %v68 = vpop.xlane.xlu0 %67
    %69 = vmax.xlane.f32.xlu0 %v41
    %v70 = vpop.xlane.xlu0 %69
    %71 = vmax.xlane.f32.xlu0 %v42
    %v72 = vpop.xlane.xlu0 %71
    %73 = vmax.xlane.f32.xlu0 %v43
    %v74 = vpop.xlane.xlu0 %73
    %75 = vmax.xlane.f32.xlu0 %v44
    %v76 = vpop.xlane.xlu0 %75
    %77 = vmax.xlane.f32.xlu0 %v45
    %v78 = vpop.xlane.xlu0 %77
    %79 = vmax.xlane.f32.xlu0 %v46
    %v80 = vpop.xlane.xlu0 %79
    %81 = vmax.xlane.f32.xlu0 %v47
    %v82 = vpop.xlane.xlu0 %81
    %83 = vmax.xlane.f32.xlu0 %v48
    %v84 = vpop.xlane.xlu0 %83
    %85 = vmax.xlane.f32.xlu0 %v49
    %v86 = vpop.xlane.xlu0 %85
    %87 = vmax.xlane.f32.xlu0 %v50
    %v88 = vpop.xlane.xlu0 %87
    %89 = vmax.xlane.f32.xlu0 %v51
    %v90 = vpop.xlane.xlu0 %89
    %91 = vmax.xlane.f32.xlu0 %v52
    %v92 = vpop.xlane.xlu0 %91
    %93 = vmax.xlane.f32.xlu0 %v53
    %v94 = vpop.xlane.xlu0 %93
    %95 = vmax.xlane.f32.xlu0 %v54
    %v96 = vpop.xlane.xlu0 %95
    %97 = vmax.xlane.f32.xlu0 %v55
    %v98 = vpop.xlane.xlu0 %97
    %99 = vmax.xlane.f32.xlu0 %v56
    %v100 = vpop.xlane.xlu0 %99
    %101 = vmax.xlane.f32.xlu0 %v57
    %v102 = vpop.xlane.xlu0 %101
    %103 = vmax.xlane.f32.xlu0 %v58
    %v104 = vpop.xlane.xlu0 %103
    %105 = vmax.xlane.f32.xlu0 %v59
    %v106 = vpop.xlane.xlu0 %105
    %107 = vmax.xlane.f32.xlu0 %v60
    %v108 = vpop.xlane.xlu0 %107
    %109 = vmax.xlane.f32.xlu0 %v61
    %v110 = vpop.xlane.xlu0 %109
    %111 = vmax.xlane.f32.xlu0 %v62
    %v112 = vpop.xlane.xlu0 %111
    %v113 = vsub.f32 %v38, %v64
    %v114 = vsub.f32 %v39, %v66
    %v115 = vsub.f32 %v40, %v68
    %v116 = vsub.f32 %v41, %v70
    %v117 = vsub.f32 %v42, %v72
    %v118 = vsub.f32 %v43, %v74
    %v119 = vsub.f32 %v44, %v76
    %v120 = vsub.f32 %v45, %v78
    %v121 = vsub.f32 %v46, %v80
    %v122 = vsub.f32 %v47, %v82
    %v123 = vsub.f32 %v48, %v84
    %v124 = vsub.f32 %v49, %v86
    %v125 = vsub.f32 %v50, %v88
    %v126 = vsub.f32 %v51, %v90
    %v127 = vsub.f32 %v52, %v92
    %v128 = vsub.f32 %v53, %v94
    %v129 = vsub.f32 %v54, %v96
    %v130 = vsub.f32 %v55, %v98
    %v131 = vsub.f32 %v56, %v100
    %v132 = vsub.f32 %v57, %v102
    %v133 = vsub.f32 %v58, %v104
    %v134 = vsub.f32 %v59, %v106
    %v135 = vsub.f32 %v60, %v108
    %v136 = vsub.f32 %v61, %v110
    %v137 = vsub.f32 %v62, %v112
    %v138 = vmul.f32 %v113, 1.442695
    %v139 = vpow.pop %v138
    %v140 = vmul.f32 %v114, 1.442695
    %v141 = vpow.pop %v140
    %v142 = vmul.f32 %v115, 1.442695
    %v143 = vpow.pop %v142
    %v144 = vmul.f32 %v116, 1.442695
    %v145 = vpow.pop %v144
    %v146 = vmul.f32 %v117, 1.442695
    %v147 = vpow.pop %v146
    %v148 = vmul.f32 %v118, 1.442695
    %v149 = vpow.pop %v148
    %v150 = vmul.f32 %v119, 1.442695
    %v151 = vpow.pop %v150
    %v152 = vmul.f32 %v120, 1.442695
    %v153 = vpow.pop %v152
    %v154 = vmul.f32 %v121, 1.442695
    %v155 = vpow.pop %v154
    %v156 = vmul.f32 %v122, 1.442695
    %v157 = vpow.pop %v156
    %v158 = vmul.f32 %v123, 1.442695
    %v159 = vpow.pop %v158
    %v160 = vmul.f32 %v124, 1.442695
    %v161 = vpow.pop %v160
    %v162 = vmul.f32 %v125, 1.442695
    %v163 = vpow.pop %v162
    %v164 = vmul.f32 %v126, 1.442695
    %v165 = vpow.pop %v164
    %v166 = vmul.f32 %v127, 1.442695
    %v167 = vpow.pop %v166
    %v168 = vmul.f32 %v128, 1.442695
    %v169 = vpow.pop %v168
    %v170 = vmul.f32 %v129, 1.442695
    %v171 = vpow.pop %v170
    %v172 = vmul.f32 %v130, 1.442695
    %v173 = vpow.pop %v172
    %v174 = vmul.f32 %v131, 1.442695
    %v175 = vpow.pop %v174
    %v176 = vmul.f32 %v132, 1.442695
    %v177 = vpow.pop %v176
    %v178 = vmul.f32 %v133, 1.442695
    %v179 = vpow.pop %v178
    %v180 = vmul.f32 %v134, 1.442695
    %v181 = vpow.pop %v180
    %v182 = vmul.f32 %v135, 1.442695
    %v183 = vpow.pop %v182
    %v184 = vmul.f32 %v136, 1.442695
    %v185 = vpow.pop %v184
    %v186 = vmul.f32 %v137, 1.442695
    %v187 = vpow.pop %v186
    %188 = vadd.xlane.f32.xlu0 %v139
    %v189 = vpop.xlane.xlu0 %188
    %190 = vadd.xlane.f32.xlu0 %v141
    %v191 = vpop.xlane.xlu0 %190
    %192 = vadd.xlane.f32.xlu0 %v143
    %v193 = vpop.xlane.xlu0 %192
    %194 = vadd.xlane.f32.xlu0 %v145
    %v195 = vpop.xlane.xlu0 %194
    %196 = vadd.xlane.f32.xlu0 %v147
    %v197 = vpop.xlane.xlu0 %196
    %198 = vadd.xlane.f32.xlu0 %v149
    %v199 = vpop.xlane.xlu0 %198
    %200 = vadd.xlane.f32.xlu0 %v151
    %v201 = vpop.xlane.xlu0 %200
    %202 = vadd.xlane.f32.xlu0 %v153
    %v203 = vpop.xlane.xlu0 %202
    %204 = vadd.xlane.f32.xlu0 %v155
    %v205 = vpop.xlane.xlu0 %204
    %206 = vadd.xlane.f32.xlu0 %v157
    %v207 = vpop.xlane.xlu0 %206
    %208 = vadd.xlane.f32.xlu0 %v159
    %v209 = vpop.xlane.xlu0 %208
    %210 = vadd.xlane.f32.xlu0 %v161
    %v211 = vpop.xlane.xlu0 %210
    %212 = vadd.xlane.f32.xlu0 %v163
    %v213 = vpop.xlane.xlu0 %212
    %214 = vadd.xlane.f32.xlu0 %v165
    %v215 = vpop.xlane.xlu0 %214
    %216 = vadd.xlane.f32.xlu0 %v167
    %v217 = vpop.xlane.xlu0 %216
    %218 = vadd.xlane.f32.xlu0 %v169
    %v219 = vpop.xlane.xlu0 %218
    %220 = vadd.xlane.f32.xlu0 %v171
    %v221 = vpop.xlane.xlu0 %220
    %222 = vadd.xlane.f32.xlu0 %v173
    %v223 = vpop.xlane.xlu0 %222
    %224 = vadd.xlane.f32.xlu0 %v175
    %v225 = vpop.xlane.xlu0 %224
    %226 = vadd.xlane.f32.xlu0 %v177
    %v227 = vpop.xlane.xlu0 %226
    %228 = vadd.xlane.f32.xlu0 %v179
    %v229 = vpop.xlane.xlu0 %228
    %230 = vadd.xlane.f32.xlu0 %v181
    %v231 = vpop.xlane.xlu0 %230
    %232 = vadd.xlane.f32.xlu0 %v183
    %v233 = vpop.xlane.xlu0 %232
    %234 = vadd.xlane.f32.xlu0 %v185
    %v235 = vpop.xlane.xlu0 %234
    %236 = vadd.xlane.f32.xlu0 %v187
    %v237 = vpop.xlane.xlu0 %236
    %v238 = vmul.f32 %v139, %v113
    %v239 = vmul.f32 %v141, %v114
    %v240 = vmul.f32 %v143, %v115
    %v241 = vmul.f32 %v145, %v116
    %v242 = vmul.f32 %v147, %v117
    %v243 = vmul.f32 %v149, %v118
    %v244 = vmul.f32 %v151, %v119
    %v245 = vmul.f32 %v153, %v120
    %v246 = vmul.f32 %v155, %v121
    %v247 = vmul.f32 %v157, %v122
    %v248 = vmul.f32 %v159, %v123
    %v249 = vmul.f32 %v161, %v124
    %v250 = vmul.f32 %v163, %v125
    %v251 = vmul.f32 %v165, %v126
    %v252 = vmul.f32 %v167, %v127
    %v253 = vmul.f32 %v169, %v128
    %v254 = vmul.f32 %v171, %v129
    %v255 = vmul.f32 %v173, %v130
    %v256 = vmul.f32 %v175, %v131
    %v257 = vmul.f32 %v177, %v132
    %v258 = vmul.f32 %v179, %v133
    %v259 = vmul.f32 %v181, %v134
    %v260 = vmul.f32 %v183, %v135
    %v261 = vmul.f32 %v185, %v136
    %v262 = vmul.f32 %v187, %v137
    %263 = vadd.xlane.f32.xlu0 %v238
    %v264 = vpop.xlane.xlu0 %263
    %265 = vadd.xlane.f32.xlu0 %v239
    %v266 = vpop.xlane.xlu0 %265
    %267 = vadd.xlane.f32.xlu0 %v240
    %v268 = vpop.xlane.xlu0 %267
    %269 = vadd.xlane.f32.xlu0 %v241
    %v270 = vpop.xlane.xlu0 %269
    %271 = vadd.xlane.f32.xlu0 %v242
    %v272 = vpop.xlane.xlu0 %271
    %273 = vadd.xlane.f32.xlu0 %v243
    %v274 = vpop.xlane.xlu0 %273
    %275 = vadd.xlane.f32.xlu0 %v244
    %v276 = vpop.xlane.xlu0 %275
    %277 = vadd.xlane.f32.xlu0 %v245
    %v278 = vpop.xlane.xlu0 %277
    %279 = vadd.xlane.f32.xlu0 %v246
    %v280 = vpop.xlane.xlu0 %279
    %281 = vadd.xlane.f32.xlu0 %v247
    %v282 = vpop.xlane.xlu0 %281
    %283 = vadd.xlane.f32.xlu0 %v248
    %v284 = vpop.xlane.xlu0 %283
    %285 = vadd.xlane.f32.xlu0 %v249
    %v286 = vpop.xlane.xlu0 %285
    %287 = vadd.xlane.f32.xlu0 %v250
    %v288 = vpop.xlane.xlu0 %287
    %289 = vadd.xlane.f32.xlu0 %v251
    %v290 = vpop.xlane.xlu0 %289
    %291 = vadd.xlane.f32.xlu0 %v252
    %v292 = vpop.xlane.xlu0 %291
    %293 = vadd.xlane.f32.xlu0 %v253
    %v294 = vpop.xlane.xlu0 %293
    %295 = vadd.xlane.f32.xlu0 %v254
    %v296 = vpop.xlane.xlu0 %295
    %297 = vadd.xlane.f32.xlu0 %v255
    %v298 = vpop.xlane.xlu0 %297
    %299 = vadd.xlane.f32.xlu0 %v256
    %v300 = vpop.xlane.xlu0 %299
    %301 = vadd.xlane.f32.xlu0 %v257
    %v302 = vpop.xlane.xlu0 %301
    %303 = vadd.xlane.f32.xlu0 %v258
    %v304 = vpop.xlane.xlu0 %303
    %305 = vadd.xlane.f32.xlu0 %v259
    %v306 = vpop.xlane.xlu0 %305
    %307 = vadd.xlane.f32.xlu0 %v260
    %v308 = vpop.xlane.xlu0 %307
    %309 = vadd.xlane.f32.xlu0 %v261
    %v310 = vpop.xlane.xlu0 %309
    %311 = vadd.xlane.f32.xlu0 %v262
    %v312 = vpop.xlane.xlu0 %311
    %v313 = vlog2.pop %v189
    %v314 = vmul.f32 %v313, 0.6931472
    %v315 = vlog2.pop %v191
    %v316 = vmul.f32 %v315, 0.6931472
    %v317 = vlog2.pop %v193
    %v318 = vmul.f32 %v317, 0.6931472
    %v319 = vlog2.pop %v195
    %v320 = vmul.f32 %v319, 0.6931472
    %v321 = vlog2.pop %v197
    %v322 = vmul.f32 %v321, 0.6931472
    %v323 = vlog2.pop %v199
    %v324 = vmul.f32 %v323, 0.6931472
    %v325 = vlog2.pop %v201
    %v326 = vmul.f32 %v325, 0.6931472
    %v327 = vlog2.pop %v203
    %v328 = vmul.f32 %v327, 0.6931472
    %v329 = vlog2.pop %v205
    %v330 = vmul.f32 %v329, 0.6931472
    %v331 = vlog2.pop %v207
    %v332 = vmul.f32 %v331, 0.6931472
    %v333 = vlog2.pop %v209
    %v334 = vmul.f32 %v333, 0.6931472
    %v335 = vlog2.pop %v211
    %v336 = vmul.f32 %v335, 0.6931472
    %v337 = vlog2.pop %v213
    %v338 = vmul.f32 %v337, 0.6931472
    %v339 = vlog2.pop %v215
    %v340 = vmul.f32 %v339, 0.6931472
    %v341 = vlog2.pop %v217
    %v342 = vmul.f32 %v341, 0.6931472
    %v343 = vlog2.pop %v219
    %v344 = vmul.f32 %v343, 0.6931472
    %v345 = vlog2.pop %v221
    %v346 = vmul.f32 %v345, 0.6931472
    %v347 = vlog2.pop %v223
    %v348 = vmul.f32 %v347, 0.6931472
    %v349 = vlog2.pop %v225
    %v350 = vmul.f32 %v349, 0.6931472
    %v351 = vlog2.pop %v227
    %v352 = vmul.f32 %v351, 0.6931472
    %v353 = vlog2.pop %v229
    %v354 = vmul.f32 %v353, 0.6931472
    %v355 = vlog2.pop %v231
    %v356 = vmul.f32 %v355, 0.6931472
    %v357 = vlog2.pop %v233
    %v358 = vmul.f32 %v357, 0.6931472
    %v359 = vlog2.pop %v235
    %v360 = vmul.f32 %v359, 0.6931472
    %v361 = vlog2.pop %v237
    %v362 = vmul.f32 %v361, 0.6931472
    %v363 = vrcp.pop %v189
    %v364 = vmul.f32 %v264, %v363
    %v365 = vrcp.pop %v191
    %v366 = vmul.f32 %v266, %v365
    %v367 = vrcp.pop %v193
    %v368 = vmul.f32 %v268, %v367
    %v369 = vrcp.pop %v195
    %v370 = vmul.f32 %v270, %v369
    %v371 = vrcp.pop %v197
    %v372 = vmul.f32 %v272, %v371
    %v373 = vrcp.pop %v199
    %v374 = vmul.f32 %v274, %v373
    %v375 = vrcp.pop %v201
    %v376 = vmul.f32 %v276, %v375
    %v377 = vrcp.pop %v203
    %v378 = vmul.f32 %v278, %v377
    %v379 = vrcp.pop %v205
    %v380 = vmul.f32 %v280, %v379
    %v381 = vrcp.pop %v207
    %v382 = vmul.f32 %v282, %v381
    %v383 = vrcp.pop %v209
    %v384 = vmul.f32 %v284, %v383
    %v385 = vrcp.pop %v211
    %v386 = vmul.f32 %v286, %v385
    %v387 = vrcp.pop %v213
    %v388 = vmul.f32 %v288, %v387
    %v389 = vrcp.pop %v215
    %v390 = vmul.f32 %v290, %v389
    %v391 = vrcp.pop %v217
    %v392 = vmul.f32 %v292, %v391
    %v393 = vrcp.pop %v219
    %v394 = vmul.f32 %v294, %v393
    %v395 = vrcp.pop %v221
    %v396 = vmul.f32 %v296, %v395
    %v397 = vrcp.pop %v223
    %v398 = vmul.f32 %v298, %v397
    %v399 = vrcp.pop %v225
    %v400 = vmul.f32 %v300, %v399
    %v401 = vrcp.pop %v227
    %v402 = vmul.f32 %v302, %v401
    %v403 = vrcp.pop %v229
    %v404 = vmul.f32 %v304, %v403
    %v405 = vrcp.pop %v231
    %v406 = vmul.f32 %v306, %v405
    %v407 = vrcp.pop %v233
    %v408 = vmul.f32 %v308, %v407
    %v409 = vrcp.pop %v235
    %v410 = vmul.f32 %v310, %v409
    %v411 = vrcp.pop %v237
    %v412 = vmul.f32 %v312, %v411
    %v413 = vsub.f32 %v314, %v364
    %v414 = vsub.f32 %v316, %v366
    %v415 = vsub.f32 %v318, %v368
    %v416 = vsub.f32 %v320, %v370
    %v417 = vsub.f32 %v322, %v372
    %v418 = vsub.f32 %v324, %v374
    %v419 = vsub.f32 %v326, %v376
    %v420 = vsub.f32 %v328, %v378
    %v421 = vsub.f32 %v330, %v380
    %v422 = vsub.f32 %v332, %v382
    %v423 = vsub.f32 %v334, %v384
    %v424 = vsub.f32 %v336, %v386
    %v425 = vsub.f32 %v338, %v388
    %v426 = vsub.f32 %v340, %v390
    %v427 = vsub.f32 %v342, %v392
    %v428 = vsub.f32 %v344, %v394
    %v429 = vsub.f32 %v346, %v396
    %v430 = vsub.f32 %v348, %v398
    %v431 = vsub.f32 %v350, %v400
    %v432 = vsub.f32 %v352, %v402
    %v433 = vsub.f32 %v354, %v404
    %v434 = vsub.f32 %v356, %v406
    %v435 = vsub.f32 %v358, %v408
    %v436 = vsub.f32 %v360, %v410
    %v437 = vsub.f32 %v362, %v412
    %s438 = sadd.s32 0, 0
    %s439 = smul.u32 %s438, 200
    %v440 = vlaneseq
    %v441 = vshrl.u32 %v440, 7
    %v442 = vadd.s32 %v441, 8
    %v443 = vadd.s32 %v441, 16
    %v444 = vadd.s32 %v441, 24
    %v445 = vadd.s32 %v441, 32
    %v446 = vadd.s32 %v441, 40
    %v447 = vadd.s32 %v441, 48
    %v448 = vadd.s32 %v441, 56
    %v449 = vadd.s32 %v441, 64
    %v450 = vadd.s32 %v441, 72
    %v451 = vadd.s32 %v441, 80
    %v452 = vadd.s32 %v441, 88
    %v453 = vadd.s32 %v441, 96
    %v454 = vadd.s32 %v441, 104
    %v455 = vadd.s32 %v441, 112
    %v456 = vadd.s32 %v441, 120
    %v457 = vadd.s32 %v441, 128
    %v458 = vadd.s32 %v441, 136
    %v459 = vadd.s32 %v441, 144
    %v460 = vadd.s32 %v441, 152
    %v461 = vadd.s32 %v441, 160
    %v462 = vadd.s32 %v441, 168
    %v463 = vadd.s32 %v441, 176
    %v464 = vadd.s32 %v441, 184
    %v465 = vadd.s32 %v441, 192
    %v466 = vstv %s439
    %v467 = vadd.s32 %v466, %v441
    %v468 = vadd.s32 %v466, %v442
    %v469 = vadd.s32 %v466, %v443
    %v470 = vadd.s32 %v466, %v444
    %v471 = vadd.s32 %v466, %v445
    %v472 = vadd.s32 %v466, %v446
    %v473 = vadd.s32 %v466, %v447
    %v474 = vadd.s32 %v466, %v448
    %v475 = vadd.s32 %v466, %v449
    %v476 = vadd.s32 %v466, %v450
    %v477 = vadd.s32 %v466, %v451
    %v478 = vadd.s32 %v466, %v452
    %v479 = vadd.s32 %v466, %v453
    %v480 = vadd.s32 %v466, %v454
    %v481 = vadd.s32 %v466, %v455
    %v482 = vadd.s32 %v466, %v456
    %v483 = vadd.s32 %v466, %v457
    %v484 = vadd.s32 %v466, %v458
    %v485 = vadd.s32 %v466, %v459
    %v486 = vadd.s32 %v466, %v460
    %v487 = vadd.s32 %v466, %v461
    %v488 = vadd.s32 %v466, %v462
    %v489 = vadd.s32 %v466, %v463
    %v490 = vadd.s32 %v466, %v464
    %v491 = vadd.s32 %v466, %v465
    %vm492 = vcmp.lt.s32.totalorder %v467, 200
    %vm493 = vcmp.lt.s32.totalorder %v468, 200
    %vm494 = vcmp.lt.s32.totalorder %v469, 200
    %vm495 = vcmp.lt.s32.totalorder %v470, 200
    %vm496 = vcmp.lt.s32.totalorder %v471, 200
    %vm497 = vcmp.lt.s32.totalorder %v472, 200
    %vm498 = vcmp.lt.s32.totalorder %v473, 200
    %vm499 = vcmp.lt.s32.totalorder %v474, 200
    %vm500 = vcmp.lt.s32.totalorder %v475, 200
    %vm501 = vcmp.lt.s32.totalorder %v476, 200
    %vm502 = vcmp.lt.s32.totalorder %v477, 200
    %vm503 = vcmp.lt.s32.totalorder %v478, 200
    %vm504 = vcmp.lt.s32.totalorder %v479, 200
    %vm505 = vcmp.lt.s32.totalorder %v480, 200
    %vm506 = vcmp.lt.s32.totalorder %v481, 200
    %vm507 = vcmp.lt.s32.totalorder %v482, 200
    %vm508 = vcmp.lt.s32.totalorder %v483, 200
    %vm509 = vcmp.lt.s32.totalorder %v484, 200
    %vm510 = vcmp.lt.s32.totalorder %v485, 200
    %vm511 = vcmp.lt.s32.totalorder %v486, 200
    %vm512 = vcmp.lt.s32.totalorder %v487, 200
    %vm513 = vcmp.lt.s32.totalorder %v488, 200
    %vm514 = vcmp.lt.s32.totalorder %v489, 200
    %vm515 = vcmp.lt.s32.totalorder %v490, 200
    %vm516 = vcmp.lt.s32.totalorder %v491, 200
    %v517 = vsel %vm492, %v413, 0.0
    %v518 = vsel %vm493, %v414, 0.0
    %v519 = vsel %vm494, %v415, 0.0
    %v520 = vsel %vm495, %v416, 0.0
    %v521 = vsel %vm496, %v417, 0.0
    %v522 = vsel %vm497, %v418, 0.0
    %v523 = vsel %vm498, %v419, 0.0
    %v524 = vsel %vm499, %v420, 0.0
    %v525 = vsel %vm500, %v421, 0.0
    %v526 = vsel %vm501, %v422, 0.0
    %v527 = vsel %vm502, %v423, 0.0
    %v528 = vsel %vm503, %v424, 0.0
    %v529 = vsel %vm504, %v425, 0.0
    %v530 = vsel %vm505, %v426, 0.0
    %v531 = vsel %vm506, %v427, 0.0
    %v532 = vsel %vm507, %v428, 0.0
    %v533 = vsel %vm508, %v429, 0.0
    %v534 = vsel %vm509, %v430, 0.0
    %v535 = vsel %vm510, %v431, 0.0
    %v536 = vsel %vm511, %v432, 0.0
    %v537 = vsel %vm512, %v433, 0.0
    %v538 = vsel %vm513, %v434, 0.0
    %v539 = vsel %vm514, %v435, 0.0
    %v540 = vsel %vm515, %v436, 0.0
    %v541 = vsel %vm516, %v437, 0.0
    %v542 = vld [vmem:[#allocation5] sm:$0x1]
    %vm543 = vcmask 7168
    %v544 = vsel %vm543, %v517, 0.0
    %v545 = vsel %vm543, %v518, 0.0
    %v546 = vadd.f32 %v544, %v545
    %v547 = vsel %vm543, %v519, 0.0
    %v548 = vadd.f32 %v546, %v547
    %v549 = vsel %vm543, %v520, 0.0
    %v550 = vadd.f32 %v548, %v549
    %v551 = vsel %vm543, %v521, 0.0
    %v552 = vadd.f32 %v550, %v551
    %v553 = vsel %vm543, %v522, 0.0
    %v554 = vadd.f32 %v552, %v553
    %v555 = vsel %vm543, %v523, 0.0
    %v556 = vadd.f32 %v554, %v555
    %v557 = vsel %vm543, %v524, 0.0
    %v558 = vadd.f32 %v556, %v557
    %v559 = vsel %vm543, %v525, 0.0
    %v560 = vadd.f32 %v558, %v559
    %v561 = vsel %vm543, %v526, 0.0
    %v562 = vadd.f32 %v560, %v561
    %v563 = vsel %vm543, %v527, 0.0
    %v564 = vadd.f32 %v562, %v563
    %v565 = vsel %vm543, %v528, 0.0
    %v566 = vadd.f32 %v564, %v565
    %v567 = vsel %vm543, %v529, 0.0
    %v568 = vadd.f32 %v566, %v567
    %v569 = vsel %vm543, %v530, 0.0
    %v570 = vadd.f32 %v568, %v569
    %v571 = vsel %vm543, %v531, 0.0
    %v572 = vadd.f32 %v570, %v571
    %v573 = vsel %vm543, %v532, 0.0
    %v574 = vadd.f32 %v572, %v573
    %v575 = vsel %vm543, %v533, 0.0
    %v576 = vadd.f32 %v574, %v575
    %v577 = vsel %vm543, %v534, 0.0
    %v578 = vadd.f32 %v576, %v577
    %v579 = vsel %vm543, %v535, 0.0
    %v580 = vadd.f32 %v578, %v579
    %v581 = vsel %vm543, %v536, 0.0
    %v582 = vadd.f32 %v580, %v581
    %v583 = vsel %vm543, %v537, 0.0
    %v584 = vadd.f32 %v582, %v583
    %v585 = vsel %vm543, %v538, 0.0
    %v586 = vadd.f32 %v584, %v585
    %v587 = vsel %vm543, %v539, 0.0
    %v588 = vadd.f32 %v586, %v587
    %v589 = vsel %vm543, %v540, 0.0
    %v590 = vadd.f32 %v588, %v589
    %v591 = vsel %vm543, %v541, 0.0
    %v592 = vadd.f32 %v590, %v591
    %593 = vadd.xlane.f32.xlu0 %v592
    %v594 = vpop.xlane.xlu0 %593
    %v595 = vrot.slane %v594, 4
    %v596 = vadd.f32 %v594, %v595
    %v597 = vrot.slane %v596, 2
    %v598 = vadd.f32 %v596, %v597
    %v599 = vrot.slane %v598, 1
    %v600 = vadd.f32 %v598, %v599
    %s601 = vtos %v600
    %v602 = vstv %s601
    %v603 = vadd.f32 %v542, %v602
    %604 = vst [vmem:[#allocation5] sm:$0x1] %v603
    // Predicated region
    $region14: #{tpu_custom_call.1} parent=1 // pred_check
      _
    $region15: #{tpu_custom_call.1} parent=1 // pred_check_branch
      %606 = sbr.rel (0) target = $region17
    $region16: #{tpu_custom_call.1} parent=1 // pred_region
      %s608 = ssub.s32 16, 16
      %609 = vsyncadd [#allocation4], %s608
      %s611 = sshll.u32 [#allocation5], 4
      %s612 = int_to_ptr.vmem [resolvable:$true] %s611
      %614 = dma.vmem_to_hbm [thread:$0]  %s612, 16, %s1, [#allocation4]
    $region17: #{tpu_custom_call.1} parent=1 // pred_fallthru
      _
    // Predicated region
    $region18: #{tpu_custom_call.1} parent=1 // pred_check
      _
    $region19: #{tpu_custom_call.1} parent=1 // pred_check_branch
      %616 = sbr.rel (0) target = $region21
    $region20: #{tpu_custom_call.1} parent=1 // pred_region
      %617 = dma.done [#allocation4], 16
    $region21: #{tpu_custom_call.1} parent=1 // pred_fallthru
      _
    %618 = vsyncpa [#allocation3], 1
    %619 = vsyncpa [#allocation4], 1

</llo_original>
